<compile_context>
chip_gen: v6e
topology: v6e:2x2x1
jax: 0.10.0
libtpu: 0.0.40
codegen_flags: <defaults>
</compile_context>

<pallas_src>
import jax
import jax.numpy as jnp
import numpy as np
from jax.experimental import pallas as pl
from jax.experimental.pallas import tpu as pltpu

_LANE = 128


def _round_up(n, m):
    return ((n + m - 1) // m) * m


# ----------------------------------------------------------------------------
# Kernel
# ----------------------------------------------------------------------------
def _make_mlp_kernel(num_layers: int, deterministic: bool):
    """Builds a Pallas kernel for a `num_layers`-deep MLP.

    Ref order:  x, mask, (W_0, b_0, ..., W_{L-1}, b_{L-1}), [gumbel], out
    (gumbel ref only present when deterministic=False).
    """

    def kernel(*refs):
        x_ref, mask_ref = refs[0], refs[1]
        param_refs = refs[2: 2 + 2 * num_layers]
        pos = 2 + 2 * num_layers
        gumbel_ref = None
        if not deterministic:
            gumbel_ref = refs[pos]
            pos += 1
        out_ref = refs[pos]

        # x = x * mask
        x = x_ref[...] * mask_ref[...]

        y = None
        for i in range(num_layers):
            w = param_refs[2 * i][...]          # (in_pad, out_pad)
            b = param_refs[2 * i + 1][...]      # (1, out_pad)
            y = jnp.dot(x, w, preferred_element_type=jnp.float32) + b
            if i < num_layers - 1:
                x = jnp.maximum(y, 0.0)         # relu

        # Softmax intentionally skipped: argmax(softmax(y)) == argmax(y) and
        # Gumbel-max sampling only needs unnormalized logits (y + g).
        # Padded logit lanes carry bias -1e30, so they never win the argmax.
        if deterministic:
            score = y
        else:
            score = y + gumbel_ref[...]

        col = jax.lax.broadcasted_iota(jnp.int32, score.shape, dimension=1)
        mx = jnp.max(score, axis=-1, keepdims=True)
        big = jnp.iinfo(jnp.int32).max
        # first index attaining the max (matches torch.argmax tie-breaking)
        idx = jnp.min(jnp.where(score == mx, col, big), axis=-1, keepdims=True)
        out_ref[...] = (col == idx).astype(out_ref.dtype)

    return kernel


# ----------------------------------------------------------------------------
# Wrapper
# ----------------------------------------------------------------------------
def mlp_forward(x, mask, params, *, deterministic=False, key=None):
    """params: list of (W_t, b) with W_t shaped (in, out), b shaped (1, out)."""
    num_layers = len(params)
    batch, in_dim = x.shape
    out_dim = params[-1][0].shape[1]

    # --- pad feature dims to multiples of 128 (lane-dense vregs / stores) ---
    dims = [params[0][0].shape[0]] + [w.shape[1] for w, _ in params]
    pdims = [_round_up(d, _LANE) for d in dims]

    neg_big = jnp.float32(-1e30)
    padded_params = []
    for li, (w, b) in enumerate(params):
        pin, pout = pdims[li], pdims[li + 1]
        wp = jnp.zeros((pin, pout), jnp.float32).at[: w.shape[0], : w.shape[1]].set(w)
        # hidden-layer pad bias = 0 (relu(0)=0, feeds zero weight rows);
        # final-layer pad bias = -1e30 so padded classes never win argmax.
        fill = neg_big if li == num_layers - 1 else jnp.float32(0.0)
        bp = jnp.full((1, pout), fill, jnp.float32).at[:, : b.shape[1]].set(b)
        padded_params.append((wp, bp))

    # --- pad batch to a multiple of the batch tile -------------------------
    tile_b = min(512, _round_up(batch, 8))
    pbatch = _round_up(batch, tile_b)
    xp = jnp.zeros((pbatch, pdims[0]), jnp.float32).at[:batch, :in_dim].set(x)
    mp = jnp.zeros((pbatch, pdims[0]), jnp.float32).at[:batch, :in_dim].set(mask)

    grid = (pbatch // tile_b,)

    in_specs = [
        pl.BlockSpec((tile_b, pdims[0]), lambda i: (i, 0)),   # x
        pl.BlockSpec((tile_b, pdims[0]), lambda i: (i, 0)),   # mask
    ]
    inputs = [xp, mp]
    for wp, bp in padded_params:
        in_specs.append(pl.BlockSpec(wp.shape, lambda i: (0, 0)))  # resident W
        in_specs.append(pl.BlockSpec(bp.shape, lambda i: (0, 0)))  # resident b
        inputs.append(wp)
        inputs.append(bp)

    if not deterministic:
        if key is None:
            key = jax.random.PRNGKey(0)
        # TODO(synk): matches torch's OneHotCategorical sampler in distribution
        # (Gumbel-max on logits), not RNG-stream-identical to torch.
        gumbel = jax.random.gumbel(key, (pbatch, pdims[-1]), jnp.float32)
        in_specs.append(pl.BlockSpec((tile_b, pdims[-1]), lambda i: (i, 0)))
        inputs.append(gumbel)

    out_spec = pl.BlockSpec((tile_b, pdims[-1]), lambda i: (i, 0))

    kernel = _make_mlp_kernel(num_layers, deterministic)
    out_padded = pl.pallas_call(
        kernel,
        out_shape=jax.ShapeDtypeStruct((pbatch, pdims[-1]), jnp.float32),
        grid=grid,
        in_specs=in_specs,
        out_specs=out_spec,
        compiler_params=pltpu.CompilerParams(
            dimension_semantics=("parallel",),
            vmem_limit_bytes=64 * 1024 * 1024,
        ),
    )(*inputs)

    return out_padded[:batch, :out_dim]


# ----------------------------------------------------------------------------
# Deterministic parameter init (orthogonal weight, gain 3.0; uniform bias)
# ----------------------------------------------------------------------------
def init_params(dims, key):
    params = []
    for i in range(1, len(dims)):
        fan_in, fan_out = dims[i - 1], dims[i]
        key, wk, bk = jax.random.split(key, 3)
        a = jax.random.normal(wk, (fan_out, fan_in), jnp.float32)
        if fan_out < fan_in:
            q, _ = jnp.linalg.qr(a.T)           # (in, out)
            w_t = 3.0 * q[:, :fan_out]
        else:
            q, _ = jnp.linalg.qr(a)             # (out, in)
            w_t = 3.0 * q[:fan_out, :fan_in].T  # store transposed (in, out)
        b = jax.random.uniform(bk, (1, fan_out), jnp.float32, -0.2, 0.2)
        params.append((w_t.astype(jnp.float32), b))
    return params


# ----------------------------------------------------------------------------
# Pure-JAX reference of the original torch forward (deterministic path)
# ----------------------------------------------------------------------------
def ref_forward_det(x, mask, params):
    h = x * mask
    for i, (w, b) in enumerate(params):
        y = h @ w + b
        h = jax.nn.softmax(y, axis=1) if i == len(params) - 1 else jnp.maximum(y, 0.0)
    idx = jnp.argmax(h, axis=-1)
    return jax.nn.one_hot(idx, h.shape[-1], dtype=jnp.float32)


# ----------------------------------------------------------------------------
# Demo
# ----------------------------------------------------------------------------
if __name__ == "__main__":
    key = jax.random.PRNGKey(0)
    dims = [16, 32, 8]          # MLP(dims): Linear(16->32) relu, Linear(32->8) softmax
    batch = 8

    k_x, k_m, k_p, k_s = jax.random.split(key, 4)
    x = jax.random.normal(k_x, (batch, dims[0]), jnp.float32)
    mask = (jax.random.uniform(k_m, (batch, dims[0])) > 0.3).astype(jnp.float32)
    params = init_params(dims, k_p)

    # deterministic=True path (argmax one-hot) -- no gumbel tensor passed.
    out_det = mlp_forward(x, mask, params, deterministic=True)
    out_det = jax.block_until_ready(out_det)

    # deterministic=False path (OneHotCategorical sample via Gumbel-max on logits).
    out_smp = mlp_forward(x, mask, params, deterministic=False, key=k_s)
    out_smp = jax.block_until_ready(out_smp)

    assert out_det.shape == (batch, dims[-1])
    assert out_smp.shape == (batch, dims[-1])
    # each row must be a valid one-hot vector
    np.testing.assert_allclose(np.asarray(out_det).sum(axis=-1), np.ones(batch))
    np.testing.assert_allclose(np.asarray(out_smp).sum(axis=-1), np.ones(batch))
    # deterministic path must match the full softmax+argmax reference
    ref = jax.block_until_ready(ref_forward_det(x, mask, params))
    np.testing.assert_allclose(np.asarray(out_det), np.asarray(ref))

    print("KERNEL_OK")
</pallas_src>

<mosaic_0001>
module attributes {stable_mosaic.version = 11 : i64} {
  func.func @kernel(%arg0: i32, %arg1: memref<8x128xf32, #tpu.memory_space<vmem>>, %arg2: memref<8x128xf32, #tpu.memory_space<vmem>>, %arg3: memref<128x128xf32, #tpu.memory_space<vmem>>, %arg4: memref<1x128xf32, #tpu.memory_space<vmem>>, %arg5: memref<128x128xf32, #tpu.memory_space<vmem>>, %arg6: memref<1x128xf32, #tpu.memory_space<vmem>>, %arg7: memref<8x128xf32, #tpu.memory_space<vmem>>) attributes {dimension_semantics = [#tpu.dimension_semantics<parallel>], iteration_bounds = array<i64: 1>, scalar_prefetch = 0 : i64, scratch_operands = 0 : i64, tpu.core_type = #tpu.core_type<tc>, window_params = [{transform_indices = @transform_0, window_bounds = array<i64: 8, 128>}, {transform_indices = @transform_1, window_bounds = array<i64: 8, 128>}, {pipeline_mode = #tpu.pipeline_mode<synchronous>, transform_indices = @transform_2, window_bounds = array<i64: 128, 128>}, {pipeline_mode = #tpu.pipeline_mode<synchronous>, transform_indices = @transform_3, window_bounds = array<i64: 1, 128>}, {pipeline_mode = #tpu.pipeline_mode<synchronous>, transform_indices = @transform_4, window_bounds = array<i64: 128, 128>}, {pipeline_mode = #tpu.pipeline_mode<synchronous>, transform_indices = @transform_5, window_bounds = array<i64: 1, 128>}, {transform_indices = @transform_6, window_bounds = array<i64: 8, 128>}]} {
    %c0 = arith.constant 0 : index
    %c0_0 = arith.constant 0 : index
    %0 = vector.load %arg1[%c0, %c0_0] : memref<8x128xf32, #tpu.memory_space<vmem>>, vector<8x128xf32>
    %c0_1 = arith.constant 0 : index
    %c0_2 = arith.constant 0 : index
    %1 = vector.load %arg2[%c0_1, %c0_2] : memref<8x128xf32, #tpu.memory_space<vmem>>, vector<8x128xf32>
    %2 = arith.mulf %0, %1 : vector<8x128xf32>
    %c0_3 = arith.constant 0 : index
    %c0_4 = arith.constant 0 : index
    %3 = vector.load %arg3[%c0_3, %c0_4] : memref<128x128xf32, #tpu.memory_space<vmem>>, vector<128x128xf32>
    %c0_5 = arith.constant 0 : index
    %c0_6 = arith.constant 0 : index
    %4 = vector.load %arg4[%c0_5, %c0_6] : memref<1x128xf32, #tpu.memory_space<vmem>>, vector<1x128xf32>
    %cst = arith.constant dense<0.000000e+00> : vector<8x128xf32>
    %5 = tpu.matmul %2, %3, %cst {dimension_numbers = #tpu.dot_dimension_numbers<[1], [0], [0], [1], [0, 0, 1, 1], [], []>} : vector<8x128xf32>, vector<128x128xf32>, vector<8x128xf32> -> vector<8x128xf32>
    %6 = vector.broadcast %4 : vector<1x128xf32> to vector<8x128xf32>
    %7 = arith.addf %5, %6 : vector<8x128xf32>
    %cst_7 = arith.constant 0.000000e+00 : f32
    %8 = vector.broadcast %cst_7 : f32 to vector<8x128xf32>
    %9 = arith.maximumf %7, %8 : vector<8x128xf32>
    %c0_8 = arith.constant 0 : index
    %c0_9 = arith.constant 0 : index
    %10 = vector.load %arg5[%c0_8, %c0_9] : memref<128x128xf32, #tpu.memory_space<vmem>>, vector<128x128xf32>
    %c0_10 = arith.constant 0 : index
    %c0_11 = arith.constant 0 : index
    %11 = vector.load %arg6[%c0_10, %c0_11] : memref<1x128xf32, #tpu.memory_space<vmem>>, vector<1x128xf32>
    %cst_12 = arith.constant dense<0.000000e+00> : vector<8x128xf32>
    %12 = tpu.matmul %9, %10, %cst_12 {dimension_numbers = #tpu.dot_dimension_numbers<[1], [0], [0], [1], [0, 0, 1, 1], [], []>} : vector<8x128xf32>, vector<128x128xf32>, vector<8x128xf32> -> vector<8x128xf32>
    %13 = vector.broadcast %11 : vector<1x128xf32> to vector<8x128xf32>
    %14 = arith.addf %12, %13 : vector<8x128xf32>
    %15 = tpu.iota {dimensions = array<i32: 1>} : vector<8x128xi32>
    %cst_13 = arith.constant dense<0xFF800000> : vector<8xf32>
    %16 = vector.multi_reduction <maximumf>, %14, %cst_13 [1] : vector<8x128xf32> to vector<8xf32>
    %17 = vector.shape_cast %16 : vector<8xf32> to vector<8x1xf32>
    %18 = vector.broadcast %17 : vector<8x1xf32> to vector<8x128xf32>
    %19 = arith.cmpf oeq, %14, %18 : vector<8x128xf32>
    %c2147483647_i32 = arith.constant 2147483647 : i32
    %20 = vector.broadcast %c2147483647_i32 : i32 to vector<8x128xi32>
    %21 = arith.select %19, %15, %20 : vector<8x128xi1>, vector<8x128xi32>
    %cst_14 = arith.constant dense<2147483647> : vector<8xi32>
    %22 = vector.multi_reduction <minsi>, %21, %cst_14 [1] : vector<8x128xi32> to vector<8xi32>
    %23 = vector.shape_cast %22 : vector<8xi32> to vector<8x1xi32>
    %24 = vector.broadcast %23 : vector<8x1xi32> to vector<8x128xi32>
    %25 = arith.cmpi eq, %15, %24 : vector<8x128xi32>
    %26 = arith.extui %25 : vector<8x128xi1> to vector<8x128xi32>
    %27 = arith.sitofp %26 : vector<8x128xi32> to vector<8x128xf32>
    %c0_15 = arith.constant 0 : index
    %c0_16 = arith.constant 0 : index
    %28 = vector.load %arg7[%c0_15, %c0_16] : memref<8x128xf32, #tpu.memory_space<vmem>>, vector<8x128xf32>
    tpu.vector_store %arg7[%c0_15, %c0_16], %27 {strides = array<i32>} : memref<8x128xf32, #tpu.memory_space<vmem>>, vector<8x128xf32>,
    return
  }
  func.func @transform_0(%arg0: i32) -> (i32, i32) {
    %c0_i32 = arith.constant 0 : i32
    %c0_i32_0 = arith.constant 0 : i32
    return %arg0, %c0_i32 : i32, i32
  }
  func.func @transform_1(%arg0: i32) -> (i32, i32) {
    %c0_i32 = arith.constant 0 : i32
    %c0_i32_0 = arith.constant 0 : i32
    return %arg0, %c0_i32 : i32, i32
  }
  func.func @transform_2(%arg0: i32) -> (i32, i32) {
    %c0_i32 = arith.constant 0 : i32
    %c0_i32_0 = arith.constant 0 : i32
    %c0_i32_1 = arith.constant 0 : i32
    return %c0_i32, %c0_i32_0 : i32, i32
  }
  func.func @transform_3(%arg0: i32) -> (i32, i32) {
    %c0_i32 = arith.constant 0 : i32
    %c0_i32_0 = arith.constant 0 : i32
    %c0_i32_1 = arith.constant 0 : i32
    return %c0_i32, %c0_i32_0 : i32, i32
  }
  func.func @transform_4(%arg0: i32) -> (i32, i32) {
    %c0_i32 = arith.constant 0 : i32
    %c0_i32_0 = arith.constant 0 : i32
    %c0_i32_1 = arith.constant 0 : i32
    return %c0_i32, %c0_i32_0 : i32, i32
  }
  func.func @transform_5(%arg0: i32) -> (i32, i32) {
    %c0_i32 = arith.constant 0 : i32
    %c0_i32_0 = arith.constant 0 : i32
    %c0_i32_1 = arith.constant 0 : i32
    return %c0_i32, %c0_i32_0 : i32, i32
  }
  func.func @transform_6(%arg0: i32) -> (i32, i32) {
    %c0_i32 = arith.constant 0 : i32
    %c0_i32_0 = arith.constant 0 : i32
    return %arg0, %c0_i32 : i32, i32
  }
}

</mosaic_0001>

<llo_original>
// kernel: tpu_custom_call.1
$region0: #{tpu_custom_call.1}
  #allocation0 [shape = 'u32[]', space=smem, size = 0x4, offset = 0x4, fixed_abs, tag = 'smem constant byte address 0x4 - core index']
  #allocation1 [shape = 'u32[144,128]{1,0:T(1,128)}', space=vmem, size = 0x12000, scoped, tag = 'internal scratch']
  %s0 = inlined_call_operand.hbm [shape: f32[8,128], index: 0, kind: input, shape index: {}]
  %s1 = inlined_call_operand.hbm [shape: f32[8,128], index: 1, kind: input, shape index: {}]
  %s2 = inlined_call_operand.hbm [shape: f32[128,128], index: 2, kind: input, shape index: {}]
  %s3 = inlined_call_operand.vmem [shape: f32[1,128], index: 3, kind: input, shape index: {}]
  %s4 = inlined_call_operand.hbm [shape: f32[128,128], index: 4, kind: input, shape index: {}]
  %s5 = inlined_call_operand.vmem [shape: f32[1,128], index: 5, kind: input, shape index: {}]
  %s6 = inlined_call_operand.hbm [shape: f32[8,128], index: 6, kind: output, shape index: {}]
  %s7 = sld [smem:[#allocation0]]
  $region50: #{tpu_custom_call.1} parent=0
    _
  %s9 = ssub.s32 1, %s7
  %s10 = scalar_select 0, %s9, %s7
  $region1: #{tpu_custom_call.1} parent=0
    #allocation2 [shape = 'u8[4096]{0}', space=vmem, size = 0x1000, scoped, tag = 'input window, operand 0, single buffered']
    #allocation3 [shape = 's32[1]{0}', space=sflag, size = 0x4, scoped, tag = 'scoped memory for tpu_custom_call.1']
    #allocation4 [shape = 's32[1]{0}', space=sflag, size = 0x4, scoped, tag = 'scoped memory for tpu_custom_call.1']
    #allocation5 [shape = 'u8[4096]{0}', space=vmem, size = 0x1000, scoped, tag = 'input window, operand 1, single buffered']
    #allocation6 [shape = 's32[1]{0}', space=sflag, size = 0x4, scoped, tag = 'scoped memory for tpu_custom_call.1']
    #allocation7 [shape = 'u8[65536]{0}', space=vmem, size = 0x10000, scoped, tag = 'input window, operand 2, single buffered']
    #allocation8 [shape = 'u8[65536]{0}', space=vmem, size = 0x10000, scoped, tag = 'input window, operand 4, single buffered']
    #allocation9 [shape = 's32[1]{0}', space=sflag, size = 0x4, scoped, tag = 'scoped memory for tpu_custom_call.1']
    #allocation10 [shape = 'u8[4096]{0}', space=vmem, size = 0x1000, scoped, tag = 'output window, operand 0, single buffered']
    %11 = vsyncpa [#allocation3], 0
    %12 = vsyncpa [#allocation6], 0
    %13 = vsyncpa [#allocation9], 0
    %14 = vsyncpa [#allocation4], 0
    // Predicated region
    $region2: #{tpu_custom_call.1} parent=1 // pred_check
      _
    $region3: #{tpu_custom_call.1} parent=1 // pred_check_branch
      %16 = sbr.rel (0) target = $region5
    $region4: #{tpu_custom_call.1} parent=1 // pred_region
      %s18 = ssub.s32 128, 128
      %19 = vsyncadd [#allocation3], %s18
      %s21 = sshll.u32 [#allocation2], 4
      %s22 = int_to_ptr.vmem [resolvable:$true] %s21
      %24 = dma.hbm_to_vmem [thread:$0]  %s0, 128, %s22, [#allocation3]
    $region5: #{tpu_custom_call.1} parent=1 // pred_fallthru
      _
    // Predicated region
    $region6: #{tpu_custom_call.1} parent=1 // pred_check
      _
    $region7: #{tpu_custom_call.1} parent=1 // pred_check_branch
      %26 = sbr.rel (0) target = $region9
    $region8: #{tpu_custom_call.1} parent=1 // pred_region
      %s28 = ssub.s32 128, 128
      %29 = vsyncadd [#allocation6], %s28
      %s31 = sshll.u32 [#allocation5], 4
      %s32 = int_to_ptr.vmem [resolvable:$true] %s31
      %34 = dma.hbm_to_vmem [thread:$0]  %s1, 128, %s32, [#allocation6]
    $region9: #{tpu_custom_call.1} parent=1 // pred_fallthru
      _
    // Predicated region
    $region10: #{tpu_custom_call.1} parent=1 // pred_check
      _
    $region11: #{tpu_custom_call.1} parent=1 // pred_check_branch
      %36 = sbr.rel (0) target = $region13
    $region12: #{tpu_custom_call.1} parent=1 // pred_region
      %s38 = ssub.s32 2048, 2048
      %39 = vsyncadd [#allocation6], %s38
      %s40 = sshll.u32 [#allocation7], 4
      %s41 = int_to_ptr.vmem [resolvable:$true] %s40
      %46 = dma.hbm_to_vmem [thread:$0]  %s2, 2048, %s41, [#allocation6], 128, 128, 8
    $region13: #{tpu_custom_call.1} parent=1 // pred_fallthru
      _
    // Predicated region
    $region14: #{tpu_custom_call.1} parent=1 // pred_check
      _
    $region15: #{tpu_custom_call.1} parent=1 // pred_check_branch
      %48 = sbr.rel (0) target = $region17
    $region16: #{tpu_custom_call.1} parent=1 // pred_region
      _
    $region17: #{tpu_custom_call.1} parent=1 // pred_fallthru
      _
    // Predicated region
    $region18: #{tpu_custom_call.1} parent=1 // pred_check
      _
    $region19: #{tpu_custom_call.1} parent=1 // pred_check_branch
      %50 = sbr.rel (0) target = $region21
    $region20: #{tpu_custom_call.1} parent=1 // pred_region
      %s52 = ssub.s32 2048, 2048
      %53 = vsyncadd [#allocation9], %s52
      %s54 = sshll.u32 [#allocation8], 4
      %s55 = int_to_ptr.vmem [resolvable:$true] %s54
      %60 = dma.hbm_to_vmem [thread:$0]  %s4, 2048, %s55, [#allocation9], 128, 128, 8
    $region21: #{tpu_custom_call.1} parent=1 // pred_fallthru
      _
    // Predicated region
    $region22: #{tpu_custom_call.1} parent=1 // pred_check
      _
    $region23: #{tpu_custom_call.1} parent=1 // pred_check_branch
      %62 = sbr.rel (0) target = $region25
    $region24: #{tpu_custom_call.1} parent=1 // pred_region
      _
    $region25: #{tpu_custom_call.1} parent=1 // pred_fallthru
      _
    // Predicated region
    $region26: #{tpu_custom_call.1} parent=1 // pred_check
      _
    $region27: #{tpu_custom_call.1} parent=1 // pred_check_branch
      %64 = sbr.rel (0) target = $region29
    $region28: #{tpu_custom_call.1} parent=1 // pred_region
      %65 = dma.done [#allocation3], 128
    $region29: #{tpu_custom_call.1} parent=1 // pred_fallthru
      _
    // Predicated region
    $region30: #{tpu_custom_call.1} parent=1 // pred_check
      _
    $region31: #{tpu_custom_call.1} parent=1 // pred_check_branch
      %67 = sbr.rel (0) target = $region33
    $region32: #{tpu_custom_call.1} parent=1 // pred_region
      %68 = dma.done [#allocation6], 128
    $region33: #{tpu_custom_call.1} parent=1 // pred_fallthru
      _
    // Predicated region
    $region34: #{tpu_custom_call.1} parent=1 // pred_check
      _
    $region35: #{tpu_custom_call.1} parent=1 // pred_check_branch
      %70 = sbr.rel (0) target = $region37
    $region36: #{tpu_custom_call.1} parent=1 // pred_region
      %71 = dma.done [#allocation6], 2048
    $region37: #{tpu_custom_call.1} parent=1 // pred_fallthru
      _
    // Predicated region
    $region38: #{tpu_custom_call.1} parent=1 // pred_check
      _
    $region39: #{tpu_custom_call.1} parent=1 // pred_check_branch
      %73 = sbr.rel (0) target = $region41
    $region40: #{tpu_custom_call.1} parent=1 // pred_region
      %74 = dma.done [#allocation9], 2048
    $region41: #{tpu_custom_call.1} parent=1 // pred_fallthru
      _
    %v75 = vld [vmem:[#allocation2] sm:$0xff]
    %v76 = vld [vmem:[#allocation5] sm:$0xff]
    %v77 = vmul.f32 %v75, %v76
    %v78 = vld [vmem:[#allocation7] sm:$0xff]
    %v79 = vld [vmem:[#allocation7 + $0x8] sm:$0xff]
    %v80 = vld [vmem:[#allocation7 + $0x10] sm:$0xff]
    %v81 = vld [vmem:[#allocation7 + $0x18] sm:$0xff]
    %v82 = vld [vmem:[#allocation7 + $0x20] sm:$0xff]
    %v83 = vld [vmem:[#allocation7 + $0x28] sm:$0xff]
    %v84 = vld [vmem:[#allocation7 + $0x30] sm:$0xff]
    %v85 = vld [vmem:[#allocation7 + $0x38] sm:$0xff]
    %v86 = vld [vmem:[#allocation7 + $0x40] sm:$0xff]
    %v87 = vld [vmem:[#allocation7 + $0x48] sm:$0xff]
    %v88 = vld [vmem:[#allocation7 + $0x50] sm:$0xff]
    %v89 = vld [vmem:[#allocation7 + $0x58] sm:$0xff]
    %v90 = vld [vmem:[#allocation7 + $0x60] sm:$0xff]
    %v91 = vld [vmem:[#allocation7 + $0x68] sm:$0xff]
    %v92 = vld [vmem:[#allocation7 + $0x70] sm:$0xff]
    %v93 = vld [vmem:[#allocation7 + $0x78] sm:$0xff]
    %v94 = vld [vmem:[%s3] sm:$0x1]
    %v96 = vlaneseq
    %v97 = vshrl.u32 %v96, 7
    %v98 = vsub.s32 0, %v97
    %v99 = vrot.slane %v94, %v98
    %101 = vmatprep.subr.mxu0 0.0
    %102 = vmatpush1.msra.mxu0 %v93
    %103 = vmatprep.subr.mxu0 0.0
    %104 = vmatpush1.msra.mxu0 %v92
    %105 = vmatprep.subr.mxu0 0.0
    %106 = vmatpush1.msra.mxu0 %v91
    %107 = vmatprep.subr.mxu0 0.0
    %108 = vmatpush1.msra.mxu0 %v90
    %109 = vmatprep.subr.mxu0 0.0
    %110 = vmatpush1.msra.mxu0 %v89
    %111 = vmatprep.subr.mxu0 0.0
    %112 = vmatpush1.msra.mxu0 %v88
    %113 = vmatprep.subr.mxu0 0.0
    %114 = vmatpush1.msra.mxu0 %v87
    %115 = vmatprep.subr.mxu0 0.0
    %116 = vmatpush1.msra.mxu0 %v86
    %117 = vmatprep.subr.mxu0 0.0
    %118 = vmatpush1.msra.mxu0 %v85
    %119 = vmatprep.subr.mxu0 0.0
    %120 = vmatpush1.msra.mxu0 %v84
    %121 = vmatprep.subr.mxu0 0.0
    %122 = vmatpush1.msra.mxu0 %v83
    %123 = vmatprep.subr.mxu0 0.0
    %124 = vmatpush1.msra.mxu0 %v82
    %125 = vmatprep.subr.mxu0 0.0
    %126 = vmatpush1.msra.mxu0 %v81
    %127 = vmatprep.subr.mxu0 0.0
    %128 = vmatpush1.msra.mxu0 %v80
    %129 = vmatprep.subr.mxu0 0.0
    %130 = vmatpush1.msra.mxu0 %v79
    %131 = vmatprep.subr.mxu0 0.0
    %132 = vmatpush1.msra.mxu0 %v78
    %133 = vmatprep.subr.mxu0 0.0
    %134 = vmatpush2.msra.mxu0 0.0
    %135 = vmatprep.subr.mxu0 0.0
    %136 = vmatpush2.msra.mxu0 0.0
    %137 = vmatprep.subr.mxu0 0.0
    %138 = vmatpush2.msra.mxu0 0.0
    %139 = vmatprep.subr.mxu0 0.0
    %140 = vmatpush2.msra.mxu0 0.0
    %141 = vmatprep.subr.mxu0 0.0
    %142 = vmatpush2.msra.mxu0 0.0
    %143 = vmatprep.subr.mxu0 0.0
    %144 = vmatpush2.msra.mxu0 0.0
    %145 = vmatprep.subr.mxu0 0.0
    %146 = vmatpush2.msra.mxu0 0.0
    %147 = vmatprep.subr.mxu0 0.0
    %148 = vmatpush2.msra.mxu0 0.0
    %149 = vmatprep.subr.mxu0 0.0
    %150 = vmatpush2.msra.mxu0 0.0
    %151 = vmatprep.subr.mxu0 0.0
    %152 = vmatpush2.msra.mxu0 0.0
    %153 = vmatprep.subr.mxu0 0.0
    %154 = vmatpush2.msra.mxu0 0.0
    %155 = vmatprep.subr.mxu0 0.0
    %156 = vmatpush2.msra.mxu0 0.0
    %157 = vmatprep.subr.mxu0 0.0
    %158 = vmatpush2.msra.mxu0 0.0
    %159 = vmatprep.subr.mxu0 0.0
    %160 = vmatpush2.msra.mxu0 0.0
    %161 = vmatprep.subr.mxu0 0.0
    %162 = vmatpush2.msra.mxu0 0.0
    %163 = vmatprep.subr.mxu0 0.0
    %164 = vmatpush2.msra.mxu0 0.0
    %165 = vmatprep.mubr.f32.mxu0 0.0
    %166 = vmatmul.mubr.f32.gmra.mxu0 %v77
    %v167 = vpop.f32.mrf.mxu0
    %v168 = vadd.f32 %v99, %v167
    %v169 = vpop.f32.mrf.mxu0
    %170 = vdwg.mxu0
    %v171 = vmax.f32 %v168, 0.0
    %v172 = vld [vmem:[#allocation8] sm:$0xff]
    %v173 = vld [vmem:[#allocation8 + $0x8] sm:$0xff]
    %v174 = vld [vmem:[#allocation8 + $0x10] sm:$0xff]
    %v175 = vld [vmem:[#allocation8 + $0x18] sm:$0xff]
    %v176 = vld [vmem:[#allocation8 + $0x20] sm:$0xff]
    %v177 = vld [vmem:[#allocation8 + $0x28] sm:$0xff]
    %v178 = vld [vmem:[#allocation8 + $0x30] sm:$0xff]
    %v179 = vld [vmem:[#allocation8 + $0x38] sm:$0xff]
    %v180 = vld [vmem:[#allocation8 + $0x40] sm:$0xff]
    %v181 = vld [vmem:[#allocation8 + $0x48] sm:$0xff]
    %v182 = vld [vmem:[#allocation8 + $0x50] sm:$0xff]
    %v183 = vld [vmem:[#allocation8 + $0x58] sm:$0xff]
    %v184 = vld [vmem:[#allocation8 + $0x60] sm:$0xff]
    %v185 = vld [vmem:[#allocation8 + $0x68] sm:$0xff]
    %v186 = vld [vmem:[#allocation8 + $0x70] sm:$0xff]
    %v187 = vld [vmem:[#allocation8 + $0x78] sm:$0xff]
    %v188 = vld [vmem:[%s5] sm:$0x1]
    %v190 = vlaneseq
    %v191 = vshrl.u32 %v190, 7
    %v192 = vsub.s32 0, %v191
    %v193 = vrot.slane %v188, %v192
    %195 = vmatprep.subr.mxu0 0.0
    %196 = vmatpush1.msra.mxu0 %v187
    %197 = vmatprep.subr.mxu0 0.0
    %198 = vmatpush1.msra.mxu0 %v186
    %199 = vmatprep.subr.mxu0 0.0
    %200 = vmatpush1.msra.mxu0 %v185
    %201 = vmatprep.subr.mxu0 0.0
    %202 = vmatpush1.msra.mxu0 %v184
    %203 = vmatprep.subr.mxu0 0.0
    %204 = vmatpush1.msra.mxu0 %v183
    %205 = vmatprep.subr.mxu0 0.0
    %206 = vmatpush1.msra.mxu0 %v182
    %207 = vmatprep.subr.mxu0 0.0
    %208 = vmatpush1.msra.mxu0 %v181
    %209 = vmatprep.subr.mxu0 0.0
    %210 = vmatpush1.msra.mxu0 %v180
    %211 = vmatprep.subr.mxu0 0.0
    %212 = vmatpush1.msra.mxu0 %v179
    %213 = vmatprep.subr.mxu0 0.0
    %214 = vmatpush1.msra.mxu0 %v178
    %215 = vmatprep.subr.mxu0 0.0
    %216 = vmatpush1.msra.mxu0 %v177
    %217 = vmatprep.subr.mxu0 0.0
    %218 = vmatpush1.msra.mxu0 %v176
    %219 = vmatprep.subr.mxu0 0.0
    %220 = vmatpush1.msra.mxu0 %v175
    %221 = vmatprep.subr.mxu0 0.0
    %222 = vmatpush1.msra.mxu0 %v174
    %223 = vmatprep.subr.mxu0 0.0
    %224 = vmatpush1.msra.mxu0 %v173
    %225 = vmatprep.subr.mxu0 0.0
    %226 = vmatpush1.msra.mxu0 %v172
    %227 = vmatprep.subr.mxu0 0.0
    %228 = vmatpush2.msra.mxu0 0.0
    %229 = vmatprep.subr.mxu0 0.0
    %230 = vmatpush2.msra.mxu0 0.0
    %231 = vmatprep.subr.mxu0 0.0
    %232 = vmatpush2.msra.mxu0 0.0
    %233 = vmatprep.subr.mxu0 0.0
    %234 = vmatpush2.msra.mxu0 0.0
    %235 = vmatprep.subr.mxu0 0.0
    %236 = vmatpush2.msra.mxu0 0.0
    %237 = vmatprep.subr.mxu0 0.0
    %238 = vmatpush2.msra.mxu0 0.0
    %239 = vmatprep.subr.mxu0 0.0
    %240 = vmatpush2.msra.mxu0 0.0
    %241 = vmatprep.subr.mxu0 0.0
    %242 = vmatpush2.msra.mxu0 0.0
    %243 = vmatprep.subr.mxu0 0.0
    %244 = vmatpush2.msra.mxu0 0.0
    %245 = vmatprep.subr.mxu0 0.0
    %246 = vmatpush2.msra.mxu0 0.0
    %247 = vmatprep.subr.mxu0 0.0
    %248 = vmatpush2.msra.mxu0 0.0
    %249 = vmatprep.subr.mxu0 0.0
    %250 = vmatpush2.msra.mxu0 0.0
    %251 = vmatprep.subr.mxu0 0.0
    %252 = vmatpush2.msra.mxu0 0.0
    %253 = vmatprep.subr.mxu0 0.0
    %254 = vmatpush2.msra.mxu0 0.0
    %255 = vmatprep.subr.mxu0 0.0
    %256 = vmatpush2.msra.mxu0 0.0
    %257 = vmatprep.subr.mxu0 0.0
    %258 = vmatpush2.msra.mxu0 0.0
    %259 = vmatprep.mubr.f32.mxu0 0.0
    %260 = vmatmul.mubr.f32.gmra.mxu0 %v171
    %v261 = vpop.f32.mrf.mxu0
    %v262 = vadd.f32 %v193, %v261
    %v263 = vpop.f32.mrf.mxu0
    %264 = vdwg.mxu0
    %v265 = vlaneseq
    %v266 = vand.u32 %v265, 127
    %267 = vmax.xlane.f32.xlu0 %v262
    %v268 = vpop.xlane.xlu0 %267
    %vm269 = vcmp.eq.f32.partialorder %v262, %v268
    %v270 = vsel %vm269, %v266, 2147483647
    %v271 = vand.u32 %v270, 65535
    %v272 = vshra.s32 %v270, 16
    %v273 = vcvt.s32.f32 %v271
    %v274 = vcvt.s32.f32 %v272
    %275 = vmin.xlane.f32.xlu0 %v274
    %v276 = vpop.xlane.xlu0 %275
    %vm277 = vcmp.eq.f32.partialorder %v274, %v276
    %v278 = vsel %vm277, %v273, inf
    %279 = vmin.xlane.f32.xlu0 %v278
    %v280 = vpop.xlane.xlu0 %279
    %v281 = vcvt.f32.s32 %v280
    %v282 = vcvt.f32.s32 %v276
    %v283 = vshll.u32 %v282, 16
    %v284 = vadd.s32 %v283, %v281
    %vm285 = vcmp.eq.s32.totalorder %v266, %v284
    %v286 = vsel %vm285, 1, 0
    %v287 = vcvt.s32.f32 %v286
    %288 = vst [vmem:[#allocation10] sm:$0xff] %v287
    // Predicated region
    $region42: #{tpu_custom_call.1} parent=1 // pred_check
      _
    $region43: #{tpu_custom_call.1} parent=1 // pred_check_branch
      %290 = sbr.rel (0) target = $region45
    $region44: #{tpu_custom_call.1} parent=1 // pred_region
      %s292 = ssub.s32 128, 128
      %293 = vsyncadd [#allocation4], %s292
      %s295 = sshll.u32 [#allocation10], 4
      %s296 = int_to_ptr.vmem [resolvable:$true] %s295
      %298 = dma.vmem_to_hbm [thread:$0]  %s296, 128, %s6, [#allocation4]
    $region45: #{tpu_custom_call.1} parent=1 // pred_fallthru
      _
    // Predicated region
    $region46: #{tpu_custom_call.1} parent=1 // pred_check
      _
    $region47: #{tpu_custom_call.1} parent=1 // pred_check_branch
      %300 = sbr.rel (0) target = $region49
    $region48: #{tpu_custom_call.1} parent=1 // pred_region
      %301 = dma.done [#allocation4], 128
    $region49: #{tpu_custom_call.1} parent=1 // pred_fallthru
      _
    %302 = vsyncpa [#allocation3], 1
    %303 = vsyncpa [#allocation6], 1
    %304 = vsyncpa [#allocation9], 1
    %305 = vsyncpa [#allocation4], 1

</llo_original>
